<compile_context>
chip_gen: v6e
topology: v6e:2x2x1
jax: 0.10.0
libtpu: 0.0.40
codegen_flags: <defaults>
</compile_context>

<pallas_src>
import functools

import jax
import jax.numpy as jnp
from jax.experimental import pallas as pl
from jax.experimental.pallas import tpu as pltpu


# Lane-dense padded hidden widths (original: num_features -> 100 -> 200 -> 100 -> 1)
H1, H2, H3 = 128, 256, 128


def _mlp_kernel(x_ref, w1_ref, b1_ref, w2_ref, b2_ref, w3_ref, b3_ref,
                w4_ref, b4_ref, o_ref):
    # Layer 1: Linear(F -> 128pad) + ReLU; f32 accumulation on the MXU.
    h = b1_ref[...] + jnp.dot(x_ref[...], w1_ref[...],
                              preferred_element_type=jnp.float32)
    h = jnp.maximum(h, 0.0)
    # Layer 2: Linear(128pad -> 256pad) + ReLU.
    h = b2_ref[...] + jnp.dot(h.astype(w2_ref.dtype), w2_ref[...],
                              preferred_element_type=jnp.float32)
    h = jnp.maximum(h, 0.0)
    # Dropout(p=0) -> identity (no-op).
    # Layer 3: Linear(256pad -> 128pad) + ReLU.
    h = b3_ref[...] + jnp.dot(h.astype(w3_ref.dtype), w3_ref[...],
                              preferred_element_type=jnp.float32)
    h = jnp.maximum(h, 0.0)
    # Layer 4: Linear(100 -> 1) as a VPU broadcast-multiply by the real weight
    # row + lane-axis reduction (XLU); avoids a 128-wide dead-column matmul
    # and a 128-wide padded store.
    y = jnp.sum(h * w4_ref[...], axis=-1, keepdims=True)      # (tm, 1) f32
    o_ref[...] = (y + b4_ref[...]).astype(o_ref.dtype)


def _pad_to(a, shape):
    return jnp.pad(a, [(0, t - s) for s, t in zip(a.shape, shape)])


def _round_up(x, m):
    return (x + m - 1) // m * m


def prepare_params(params, num_features, *, use_bf16=True):
    """Pad to lane-dense widths and cast ONCE (outside the jitted forward)."""
    wdt = jnp.bfloat16 if use_bf16 else jnp.float32
    w1 = _pad_to(params["w1"], (num_features, H1)).astype(wdt)
    w2 = _pad_to(params["w2"], (H1, H2)).astype(wdt)
    w3 = _pad_to(params["w3"], (H2, H3)).astype(wdt)
    # Layer 4 weight is used as a VPU broadcast factor (never hits the MXU):
    # keep it f32, stored as a (1, H3) row.
    w4 = _pad_to(params["w4"], (H3, 1)).T.astype(jnp.float32)
    # Biases add onto the f32 accumulator -> keep f32.
    b1 = _pad_to(params["b1"], (1, H1)).astype(jnp.float32)
    b2 = _pad_to(params["b2"], (1, H2)).astype(jnp.float32)
    b3 = _pad_to(params["b3"], (1, H3)).astype(jnp.float32)
    b4 = params["b4"].reshape(1, 1).astype(jnp.float32)
    return (w1, b1, w2, b2, w3, b3, w4, b4)


@functools.partial(jax.jit, static_argnames=("tm",))
def linear_net_forward(x, prepared, *, tm=512):
    """x: [B, num_features] float32. prepared: output of prepare_params()."""
    B, F = x.shape
    w1, b1, w2, b2, w3, b3, w4, b4 = prepared

    # Effective batch tile: big for pipeline efficiency, multiple of 8
    # sublanes, never larger than the (padded) batch, and capped so large
    # batches yield >= 2 grid steps for v7x's two TensorCores.
    tm_eff = min(tm, _round_up(B, 8))
    if B >= 16:
        tm_eff = min(tm_eff, _round_up((B + 1) // 2, 8))
    tm_eff = max(tm_eff, 8)
    n_tiles = (B + tm_eff - 1) // tm_eff
    Bp = n_tiles * tm_eff

    # Pad batch to a tile multiple and match the weight dtype (bf16 operands,
    # f32 accumulation in-kernel).
    xp = jnp.pad(x, ((0, Bp - B), (0, 0))).astype(w1.dtype)

    def _resident(arr):
        # Full-array block with a constant block index: stays VMEM-resident
        # across the grid (Pallas does not re-DMA an unchanged block).
        return pl.BlockSpec(arr.shape, lambda i: (0, 0))

    in_specs = [
        pl.BlockSpec((tm_eff, F), lambda i: (i, 0)),   # x: tiled along batch
        _resident(w1), _resident(b1),
        _resident(w2), _resident(b2),
        _resident(w3), _resident(b3),
        _resident(w4), _resident(b4),
    ]

    cp_kwargs = dict(dimension_semantics=("parallel",))
    if tm_eff >= 2048:
        # v5e's scoped-VMEM default is 16 MiB; give headroom for huge tiles.
        cp_kwargs["vmem_limit_bytes"] = 32 * 1024 * 1024

    y = pl.pallas_call(
        _mlp_kernel,
        out_shape=jax.ShapeDtypeStruct((Bp, 1), jnp.float32),
        grid=(n_tiles,),
        in_specs=in_specs,
        out_specs=pl.BlockSpec((tm_eff, 1), lambda i: (i, 0)),
        compiler_params=pltpu.CompilerParams(**cp_kwargs),
    )(xp, w1, b1, w2, b2, w3, b3, w4, b4)

    return y[:B]   # drop batch padding; output already (B, 1)


def init_params(key, num_features):
    """Deterministic init mimicking PyTorch nn.Linear default (U[-1/sqrt(fan_in), +])."""
    dims = [(num_features, 100), (100, 200), (200, 100), (100, 1)]
    params = {}
    for i, (fan_in, fan_out) in enumerate(dims, start=1):
        key, kw, kb = jax.random.split(key, 3)
        bound = 1.0 / jnp.sqrt(float(fan_in))
        # stored as [in, out] (transposed w.r.t. torch's [out, in])
        params[f"w{i}"] = jax.random.uniform(
            kw, (fan_in, fan_out), jnp.float32, -bound, bound)
        params[f"b{i}"] = jax.random.uniform(
            kb, (1, fan_out), jnp.float32, -bound, bound)
    return params


if __name__ == "__main__":
    key = jax.random.PRNGKey(0)
    num_features = 32
    batch = 8

    key, kx = jax.random.split(key)
    x = jax.random.normal(kx, (batch, num_features), jnp.float32)
    params = init_params(key, num_features)

    # One-time padding/cast outside the jitted forward (perf review item).
    prepared = prepare_params(params, num_features, use_bf16=True)

    out = linear_net_forward(x, prepared)
    out = jax.block_until_ready(out)

    # Reference check in plain f32 JAX (unpadded math). bf16 operands in the
    # kernel -> loosened tolerance vs. the f32 reference.
    def ref(x, p):
        h = jnp.maximum(x @ p["w1"] + p["b1"], 0.0)
        h = jnp.maximum(h @ p["w2"] + p["b2"], 0.0)
        h = jnp.maximum(h @ p["w3"] + p["b3"], 0.0)
        return h @ p["w4"] + p["b4"]

    expected = ref(x, params)
    assert out.shape == (batch, 1), out.shape
    assert jnp.allclose(out, expected, atol=5e-2, rtol=5e-2), "mismatch vs reference"
    print("KERNEL_OK")
</pallas_src>

<mosaic_0001>
module attributes {stable_mosaic.version = 11 : i64} {
  func.func @_mlp_kernel(%arg0: i32, %arg1: memref<8x32xbf16, #tpu.memory_space<vmem>>, %arg2: memref<32x128xbf16, #tpu.memory_space<vmem>>, %arg3: memref<1x128xf32, #tpu.memory_space<vmem>>, %arg4: memref<128x256xbf16, #tpu.memory_space<vmem>>, %arg5: memref<1x256xf32, #tpu.memory_space<vmem>>, %arg6: memref<256x128xbf16, #tpu.memory_space<vmem>>, %arg7: memref<1x128xf32, #tpu.memory_space<vmem>>, %arg8: memref<1x128xf32, #tpu.memory_space<vmem>>, %arg9: memref<1x1xf32, #tpu.memory_space<vmem>>, %arg10: memref<8x1xf32, #tpu.memory_space<vmem>>) attributes {dimension_semantics = [#tpu.dimension_semantics<parallel>], iteration_bounds = array<i64: 1>, scalar_prefetch = 0 : i64, scratch_operands = 0 : i64, tpu.core_type = #tpu.core_type<tc>, window_params = [{transform_indices = @transform_0, window_bounds = array<i64: 8, 32>}, {pipeline_mode = #tpu.pipeline_mode<synchronous>, transform_indices = @transform_1, window_bounds = array<i64: 32, 128>}, {pipeline_mode = #tpu.pipeline_mode<synchronous>, transform_indices = @transform_2, window_bounds = array<i64: 1, 128>}, {pipeline_mode = #tpu.pipeline_mode<synchronous>, transform_indices = @transform_3, window_bounds = array<i64: 128, 256>}, {pipeline_mode = #tpu.pipeline_mode<synchronous>, transform_indices = @transform_4, window_bounds = array<i64: 1, 256>}, {pipeline_mode = #tpu.pipeline_mode<synchronous>, transform_indices = @transform_5, window_bounds = array<i64: 256, 128>}, {pipeline_mode = #tpu.pipeline_mode<synchronous>, transform_indices = @transform_6, window_bounds = array<i64: 1, 128>}, {pipeline_mode = #tpu.pipeline_mode<synchronous>, transform_indices = @transform_7, window_bounds = array<i64: 1, 128>}, {pipeline_mode = #tpu.pipeline_mode<synchronous>, transform_indices = @transform_8, window_bounds = array<i64: 1, 1>}, {transform_indices = @transform_9, window_bounds = array<i64: 8, 1>}]} {
    %c0 = arith.constant 0 : index
    %c0_0 = arith.constant 0 : index
    %0 = vector.load %arg3[%c0, %c0_0] : memref<1x128xf32, #tpu.memory_space<vmem>>, vector<1x128xf32>
    %c0_1 = arith.constant 0 : index
    %c0_2 = arith.constant 0 : index
    %1 = vector.load %arg1[%c0_1, %c0_2] : memref<8x32xbf16, #tpu.memory_space<vmem>>, vector<8x32xbf16>
    %c0_3 = arith.constant 0 : index
    %c0_4 = arith.constant 0 : index
    %2 = vector.load %arg2[%c0_3, %c0_4] : memref<32x128xbf16, #tpu.memory_space<vmem>>, vector<32x128xbf16>
    %cst = arith.constant dense<0.000000e+00> : vector<8x128xf32>
    %3 = tpu.matmul %1, %2, %cst {dimension_numbers = #tpu.dot_dimension_numbers<[1], [0], [0], [1], [0, 0, 1, 1], [], []>} : vector<8x32xbf16>, vector<32x128xbf16>, vector<8x128xf32> -> vector<8x128xf32>
    %4 = vector.broadcast %0 : vector<1x128xf32> to vector<8x128xf32>
    %5 = arith.addf %4, %3 : vector<8x128xf32>
    %cst_5 = arith.constant 0.000000e+00 : f32
    %6 = vector.broadcast %cst_5 : f32 to vector<8x128xf32>
    %7 = arith.maximumf %5, %6 : vector<8x128xf32>
    %c0_6 = arith.constant 0 : index
    %c0_7 = arith.constant 0 : index
    %8 = vector.load %arg5[%c0_6, %c0_7] : memref<1x256xf32, #tpu.memory_space<vmem>>, vector<1x256xf32>
    %9 = arith.truncf %7 : vector<8x128xf32> to vector<8x128xbf16>
    %c0_8 = arith.constant 0 : index
    %c0_9 = arith.constant 0 : index
    %10 = vector.load %arg4[%c0_8, %c0_9] : memref<128x256xbf16, #tpu.memory_space<vmem>>, vector<128x256xbf16>
    %cst_10 = arith.constant dense<0.000000e+00> : vector<8x256xf32>
    %11 = tpu.matmul %9, %10, %cst_10 {dimension_numbers = #tpu.dot_dimension_numbers<[1], [0], [0], [1], [0, 0, 1, 1], [], []>} : vector<8x128xbf16>, vector<128x256xbf16>, vector<8x256xf32> -> vector<8x256xf32>
    %12 = vector.broadcast %8 : vector<1x256xf32> to vector<8x256xf32>
    %13 = arith.addf %12, %11 : vector<8x256xf32>
    %cst_11 = arith.constant 0.000000e+00 : f32
    %14 = vector.broadcast %cst_11 : f32 to vector<8x256xf32>
    %15 = arith.maximumf %13, %14 : vector<8x256xf32>
    %c0_12 = arith.constant 0 : index
    %c0_13 = arith.constant 0 : index
    %16 = vector.load %arg7[%c0_12, %c0_13] : memref<1x128xf32, #tpu.memory_space<vmem>>, vector<1x128xf32>
    %17 = arith.truncf %15 : vector<8x256xf32> to vector<8x256xbf16>
    %c0_14 = arith.constant 0 : index
    %c0_15 = arith.constant 0 : index
    %18 = vector.load %arg6[%c0_14, %c0_15] : memref<256x128xbf16, #tpu.memory_space<vmem>>, vector<256x128xbf16>
    %cst_16 = arith.constant dense<0.000000e+00> : vector<8x128xf32>
    %19 = tpu.matmul %17, %18, %cst_16 {dimension_numbers = #tpu.dot_dimension_numbers<[1], [0], [0], [1], [0, 0, 1, 1], [], []>} : vector<8x256xbf16>, vector<256x128xbf16>, vector<8x128xf32> -> vector<8x128xf32>
    %20 = vector.broadcast %16 : vector<1x128xf32> to vector<8x128xf32>
    %21 = arith.addf %20, %19 : vector<8x128xf32>
    %cst_17 = arith.constant 0.000000e+00 : f32
    %22 = vector.broadcast %cst_17 : f32 to vector<8x128xf32>
    %23 = arith.maximumf %21, %22 : vector<8x128xf32>
    %c0_18 = arith.constant 0 : index
    %c0_19 = arith.constant 0 : index
    %24 = vector.load %arg8[%c0_18, %c0_19] : memref<1x128xf32, #tpu.memory_space<vmem>>, vector<1x128xf32>
    %25 = vector.broadcast %24 : vector<1x128xf32> to vector<8x128xf32>
    %26 = arith.mulf %23, %25 : vector<8x128xf32>
    %cst_20 = arith.constant dense<0.000000e+00> : vector<8xf32>
    %27 = vector.multi_reduction <add>, %26, %cst_20 [1] : vector<8x128xf32> to vector<8xf32>
    %28 = vector.shape_cast %27 : vector<8xf32> to vector<8x1xf32>
    %c0_21 = arith.constant 0 : index
    %c0_22 = arith.constant 0 : index
    %29 = vector.load %arg9[%c0_21, %c0_22] : memref<1x1xf32, #tpu.memory_space<vmem>>, vector<1x1xf32>
    %30 = vector.broadcast %29 : vector<1x1xf32> to vector<8x1xf32>
    %31 = arith.addf %28, %30 : vector<8x1xf32>
    %c0_23 = arith.constant 0 : index
    %c0_24 = arith.constant 0 : index
    %32 = vector.load %arg10[%c0_23, %c0_24] : memref<8x1xf32, #tpu.memory_space<vmem>>, vector<8x1xf32>
    tpu.vector_store %arg10[%c0_23, %c0_24], %31 {strides = array<i32>} : memref<8x1xf32, #tpu.memory_space<vmem>>, vector<8x1xf32>,
    return
  }
  func.func @transform_0(%arg0: i32) -> (i32, i32) {
    %c0_i32 = arith.constant 0 : i32
    %c0_i32_0 = arith.constant 0 : i32
    return %arg0, %c0_i32 : i32, i32
  }
  func.func @transform_1(%arg0: i32) -> (i32, i32) {
    %c0_i32 = arith.constant 0 : i32
    %c0_i32_0 = arith.constant 0 : i32
    %c0_i32_1 = arith.constant 0 : i32
    return %c0_i32, %c0_i32_0 : i32, i32
  }
  func.func @transform_2(%arg0: i32) -> (i32, i32) {
    %c0_i32 = arith.constant 0 : i32
    %c0_i32_0 = arith.constant 0 : i32
    %c0_i32_1 = arith.constant 0 : i32
    return %c0_i32, %c0_i32_0 : i32, i32
  }
  func.func @transform_3(%arg0: i32) -> (i32, i32) {
    %c0_i32 = arith.constant 0 : i32
    %c0_i32_0 = arith.constant 0 : i32
    %c0_i32_1 = arith.constant 0 : i32
    return %c0_i32, %c0_i32_0 : i32, i32
  }
  func.func @transform_4(%arg0: i32) -> (i32, i32) {
    %c0_i32 = arith.constant 0 : i32
    %c0_i32_0 = arith.constant 0 : i32
    %c0_i32_1 = arith.constant 0 : i32
    return %c0_i32, %c0_i32_0 : i32, i32
  }
  func.func @transform_5(%arg0: i32) -> (i32, i32) {
    %c0_i32 = arith.constant 0 : i32
    %c0_i32_0 = arith.constant 0 : i32
    %c0_i32_1 = arith.constant 0 : i32
    return %c0_i32, %c0_i32_0 : i32, i32
  }
  func.func @transform_6(%arg0: i32) -> (i32, i32) {
    %c0_i32 = arith.constant 0 : i32
    %c0_i32_0 = arith.constant 0 : i32
    %c0_i32_1 = arith.constant 0 : i32
    return %c0_i32, %c0_i32_0 : i32, i32
  }
  func.func @transform_7(%arg0: i32) -> (i32, i32) {
    %c0_i32 = arith.constant 0 : i32
    %c0_i32_0 = arith.constant 0 : i32
    %c0_i32_1 = arith.constant 0 : i32
    return %c0_i32, %c0_i32_0 : i32, i32
  }
  func.func @transform_8(%arg0: i32) -> (i32, i32) {
    %c0_i32 = arith.constant 0 : i32
    %c0_i32_0 = arith.constant 0 : i32
    %c0_i32_1 = arith.constant 0 : i32
    return %c0_i32, %c0_i32_0 : i32, i32
  }
  func.func @transform_9(%arg0: i32) -> (i32, i32) {
    %c0_i32 = arith.constant 0 : i32
    %c0_i32_0 = arith.constant 0 : i32
    return %arg0, %c0_i32 : i32, i32
  }
}

</mosaic_0001>

<llo_original>
// kernel: linear_net_forward.1
$region0: #{linear_net_forward.1}
  #allocation0 [shape = 'u32[]', space=smem, size = 0x4, offset = 0x4, fixed_abs, tag = 'smem constant byte address 0x4 - core index']
  #allocation1 [shape = 'u32[144,128]{1,0:T(1,128)}', space=vmem, size = 0x12000, scoped, tag = 'internal scratch']
  #allocation2 [shape = 'f32[1,1]{1,0:T(1,128)S(1)}', space=vmem, size = 0x200, scoped, tag = 'scoped memory for linear_net_forward.1']
  %s0 = inlined_call_operand.vmem [shape: bf16[8,32], index: 0, kind: input, shape index: {}]
  %s1 = inlined_call_operand.hbm [shape: bf16[32,128], index: 1, kind: input, shape index: {}]
  %s2 = inlined_call_operand.vmem [shape: f32[1,128], index: 2, kind: input, shape index: {}]
  %s3 = inlined_call_operand.hbm [shape: bf16[128,256], index: 3, kind: input, shape index: {}]
  %s4 = inlined_call_operand.vmem [shape: f32[1,256], index: 4, kind: input, shape index: {}]
  %s5 = inlined_call_operand.hbm [shape: bf16[256,128], index: 5, kind: input, shape index: {}]
  %s6 = inlined_call_operand.vmem [shape: f32[1,128], index: 6, kind: input, shape index: {}]
  %s7 = inlined_call_operand.vmem [shape: f32[1,128], index: 7, kind: input, shape index: {}]
  %s8 = inlined_call_operand.<no memory space> [shape: f32[1,1], index: 8, kind: input, shape index: {}]
  %s9 = inlined_call_operand.vmem [shape: f32[8,1], index: 9, kind: output, shape index: {}]
  %s10 = sld [smem:[#allocation0]]
  $region58: #{linear_net_forward.1} parent=0
    _
  %s12 = ssub.s32 1, %s10
  %s13 = scalar_select 0, %s12, %s10
  %v14 = vstv %s8
  %15 = vst [vmem:[#allocation2] sm:$0x1] %v14
  $region1: #{linear_net_forward.1} parent=0
    #allocation3 [shape = 'u8[8192]{0}', space=vmem, size = 0x2000, scoped, tag = 'input window, operand 1, single buffered']
    #allocation4 [shape = 's32[1]{0}', space=sflag, size = 0x4, scoped, tag = 'scoped memory for linear_net_forward.1']
    #allocation5 [shape = 'u8[65536]{0}', space=vmem, size = 0x10000, scoped, tag = 'input window, operand 3, single buffered']
    #allocation6 [shape = 's32[1]{0}', space=sflag, size = 0x4, scoped, tag = 'scoped memory for linear_net_forward.1']
    #allocation7 [shape = 'u8[65536]{0}', space=vmem, size = 0x10000, scoped, tag = 'input window, operand 5, single buffered']
    %16 = vsyncpa [#allocation4], 0
    %17 = vsyncpa [#allocation6], 0
    // Predicated region
    $region2: #{linear_net_forward.1} parent=1 // pred_check
      _
    $region3: #{linear_net_forward.1} parent=1 // pred_check_branch
      %19 = sbr.rel (0) target = $region5
    $region4: #{linear_net_forward.1} parent=1 // pred_region
      _
    $region5: #{linear_net_forward.1} parent=1 // pred_fallthru
      _
    // Predicated region
    $region6: #{linear_net_forward.1} parent=1 // pred_check
      _
    $region7: #{linear_net_forward.1} parent=1 // pred_check_branch
      %21 = sbr.rel (0) target = $region9
    $region8: #{linear_net_forward.1} parent=1 // pred_region
      %s23 = ssub.s32 256, 256
      %24 = vsyncadd [#allocation4], %s23
      %s25 = sshll.u32 [#allocation3], 4
      %s26 = int_to_ptr.vmem [resolvable:$true] %s25
      %31 = dma.hbm_to_vmem [thread:$0]  %s1, 256, %s26, [#allocation4], 64, 64, 4
    $region9: #{linear_net_forward.1} parent=1 // pred_fallthru
      _
    // Predicated region
    $region10: #{linear_net_forward.1} parent=1 // pred_check
      _
    $region11: #{linear_net_forward.1} parent=1 // pred_check_branch
      %33 = sbr.rel (0) target = $region13
    $region12: #{linear_net_forward.1} parent=1 // pred_region
      _
    $region13: #{linear_net_forward.1} parent=1 // pred_fallthru
      _
    // Predicated region
    $region14: #{linear_net_forward.1} parent=1 // pred_check
      _
    $region15: #{linear_net_forward.1} parent=1 // pred_check_branch
      %35 = sbr.rel (0) target = $region17
    $region16: #{linear_net_forward.1} parent=1 // pred_region
      %s37 = ssub.s32 2048, 2048
      %38 = vsyncadd [#allocation6], %s37
      %s39 = sshll.u32 [#allocation5], 4
      %s40 = int_to_ptr.vmem [resolvable:$true] %s39
      %45 = dma.hbm_to_vmem [thread:$0]  %s3, 2048, %s40, [#allocation6], 128, 128, 8
    $region17: #{linear_net_forward.1} parent=1 // pred_fallthru
      _
    // Predicated region
    $region18: #{linear_net_forward.1} parent=1 // pred_check
      _
    $region19: #{linear_net_forward.1} parent=1 // pred_check_branch
      %47 = sbr.rel (0) target = $region21
    $region20: #{linear_net_forward.1} parent=1 // pred_region
      _
    $region21: #{linear_net_forward.1} parent=1 // pred_fallthru
      _
    // Predicated region
    $region22: #{linear_net_forward.1} parent=1 // pred_check
      _
    $region23: #{linear_net_forward.1} parent=1 // pred_check_branch
      %49 = sbr.rel (0) target = $region25
    $region24: #{linear_net_forward.1} parent=1 // pred_region
      %s51 = ssub.s32 2048, 2048
      %52 = vsyncadd [#allocation6], %s51
      %s53 = sshll.u32 [#allocation7], 4
      %s54 = int_to_ptr.vmem [resolvable:$true] %s53
      %59 = dma.hbm_to_vmem [thread:$0]  %s5, 2048, %s54, [#allocation6], 64, 64, 4
    $region25: #{linear_net_forward.1} parent=1 // pred_fallthru
      _
    // Predicated region
    $region26: #{linear_net_forward.1} parent=1 // pred_check
      _
    $region27: #{linear_net_forward.1} parent=1 // pred_check_branch
      %61 = sbr.rel (0) target = $region29
    $region28: #{linear_net_forward.1} parent=1 // pred_region
      _
    $region29: #{linear_net_forward.1} parent=1 // pred_fallthru
      _
    // Predicated region
    $region30: #{linear_net_forward.1} parent=1 // pred_check
      _
    $region31: #{linear_net_forward.1} parent=1 // pred_check_branch
      %63 = sbr.rel (0) target = $region33
    $region32: #{linear_net_forward.1} parent=1 // pred_region
      _
    $region33: #{linear_net_forward.1} parent=1 // pred_fallthru
      _
    // Predicated region
    $region34: #{linear_net_forward.1} parent=1 // pred_check
      _
    $region35: #{linear_net_forward.1} parent=1 // pred_check_branch
      %65 = sbr.rel (0) target = $region37
    $region36: #{linear_net_forward.1} parent=1 // pred_region
      _
    $region37: #{linear_net_forward.1} parent=1 // pred_fallthru
      _
    // Predicated region
    $region38: #{linear_net_forward.1} parent=1 // pred_check
      _
    $region39: #{linear_net_forward.1} parent=1 // pred_check_branch
      %67 = sbr.rel (0) target = $region41
    $region40: #{linear_net_forward.1} parent=1 // pred_region
      %68 = dma.done [#allocation4], 256
    $region41: #{linear_net_forward.1} parent=1 // pred_fallthru
      _
    // Predicated region
    $region42: #{linear_net_forward.1} parent=1 // pred_check
      _
    $region43: #{linear_net_forward.1} parent=1 // pred_check_branch
      %70 = sbr.rel (0) target = $region45
    $region44: #{linear_net_forward.1} parent=1 // pred_region
      %71 = dma.done [#allocation6], 2048
    $region45: #{linear_net_forward.1} parent=1 // pred_fallthru
      _
    // Predicated region
    $region46: #{linear_net_forward.1} parent=1 // pred_check
      _
    $region47: #{linear_net_forward.1} parent=1 // pred_check_branch
      %73 = sbr.rel (0) target = $region49
    $region48: #{linear_net_forward.1} parent=1 // pred_region
      %74 = dma.done [#allocation6], 2048
    $region49: #{linear_net_forward.1} parent=1 // pred_fallthru
      _
    %v76 = vld [vmem:[%s2] sm:$0x1]
    %v77 = vld [vmem:[%s0] sm:$0xf]
    %v78 = vld [vmem:[#allocation3] sm:$0xf]
    %v79 = vld [vmem:[#allocation3 + $0x4] sm:$0xf]
    %v80 = vld [vmem:[#allocation3 + $0x8] sm:$0xf]
    %v81 = vld [vmem:[#allocation3 + $0xc] sm:$0xf]
    %v86 = vunpack.c.l.b16 %v78
    %v87 = vunpack.c.l.b16 %v79
    %v88 = vunpack.c.l.b16 %v80
    %v89 = vunpack.c.l.b16 %v81
    %v90 = vpack.c.b16 %v87, %v86
    %v91 = vpack.c.b16 %v89, %v88
    %vm94 = vcmask 261120
    %v96 = vsel %vm94, %v77, 0
    %98 = vmatprep.subr.bf16.mxu0 0
    %99 = vmatpush1.bf16.msra.mxu0 0
    %100 = vmatprep.subr.bf16.mxu0 0
    %101 = vmatpush1.bf16.msra.mxu0 0
    %102 = vmatprep.subr.bf16.mxu0 0
    %103 = vmatpush1.bf16.msra.mxu0 0
    %104 = vmatprep.subr.bf16.mxu0 0
    %105 = vmatpush1.bf16.msra.mxu0 0
    %106 = vmatprep.subr.bf16.mxu0 0
    %107 = vmatpush1.bf16.msra.mxu0 0
    %108 = vmatprep.subr.bf16.mxu0 0
    %109 = vmatpush1.bf16.msra.mxu0 0
    %110 = vmatprep.subr.bf16.mxu0 0
    %111 = vmatpush1.bf16.msra.mxu0 %v91
    %112 = vmatprep.subr.bf16.mxu0 0
    %113 = vmatpush1.bf16.msra.mxu0 %v90
    %114 = vmatprep.subr.bf16.mxu0 0
    %115 = vmatpush2.bf16.msra.mxu0 0
    %116 = vmatprep.subr.bf16.mxu0 0
    %117 = vmatpush2.bf16.msra.mxu0 0
    %118 = vmatprep.subr.bf16.mxu0 0
    %119 = vmatpush2.bf16.msra.mxu0 0
    %120 = vmatprep.subr.bf16.mxu0 0
    %121 = vmatpush2.bf16.msra.mxu0 0
    %122 = vmatprep.subr.bf16.mxu0 0
    %123 = vmatpush2.bf16.msra.mxu0 0
    %124 = vmatprep.subr.bf16.mxu0 0
    %125 = vmatpush2.bf16.msra.mxu0 0
    %126 = vmatprep.subr.bf16.mxu0 0
    %127 = vmatpush2.bf16.msra.mxu0 0
    %128 = vmatprep.subr.bf16.mxu0 0
    %129 = vmatpush2.bf16.msra.mxu0 0
    %130 = vmatprep.mubr.bf16.mxu0 0
    %131 = vmatmul.mubr.bf16.gmra.mxu0 %v96
    %v132 = vpop.f32.mrf.mxu0
    %v133 = vadd.f32 0.0, %v132
    %v134 = vpop.f32.mrf.mxu0
    %v135 = vpop.f32.mrf.mxu0
    %v136 = vpop.f32.mrf.mxu0
    %137 = vdwg.mxu0
    %v139 = vlaneseq
    %v140 = vshrl.u32 %v139, 7
    %v141 = vsub.s32 0, %v140
    %v142 = vrot.slane %v76, %v141
    %v144 = vadd.f32 %v142, %v133
    %v145 = vmax.f32 %v144, 0.0
    %v146 = vld [vmem:[%s4] sm:$0x3]
    %v147 = vpack.c.bf16 %v145, %v145
    %v148 = vld [vmem:[#allocation5] sm:$0xff]
    %v149 = vld [vmem:[#allocation5 + $0x8] sm:$0xff]
    %v150 = vld [vmem:[#allocation5 + $0x10] sm:$0xff]
    %v151 = vld [vmem:[#allocation5 + $0x18] sm:$0xff]
    %v152 = vld [vmem:[#allocation5 + $0x20] sm:$0xff]
    %v153 = vld [vmem:[#allocation5 + $0x28] sm:$0xff]
    %v154 = vld [vmem:[#allocation5 + $0x30] sm:$0xff]
    %v155 = vld [vmem:[#allocation5 + $0x38] sm:$0xff]
    %v156 = vld [vmem:[#allocation5 + $0x40] sm:$0xff]
    %v157 = vld [vmem:[#allocation5 + $0x48] sm:$0xff]
    %v158 = vld [vmem:[#allocation5 + $0x50] sm:$0xff]
    %v159 = vld [vmem:[#allocation5 + $0x58] sm:$0xff]
    %v160 = vld [vmem:[#allocation5 + $0x60] sm:$0xff]
    %v161 = vld [vmem:[#allocation5 + $0x68] sm:$0xff]
    %v162 = vld [vmem:[#allocation5 + $0x70] sm:$0xff]
    %v163 = vld [vmem:[#allocation5 + $0x78] sm:$0xff]
    %v180 = vunpack.c.l.b16 %v148
    %v181 = vunpack.c.h.b16 %v148
    %v182 = vunpack.c.l.b16 %v149
    %v183 = vunpack.c.h.b16 %v149
    %v184 = vunpack.c.l.b16 %v150
    %v185 = vunpack.c.h.b16 %v150
    %v186 = vunpack.c.l.b16 %v151
    %v187 = vunpack.c.h.b16 %v151
    %v188 = vunpack.c.l.b16 %v152
    %v189 = vunpack.c.h.b16 %v152
    %v190 = vunpack.c.l.b16 %v153
    %v191 = vunpack.c.h.b16 %v153
    %v192 = vunpack.c.l.b16 %v154
    %v193 = vunpack.c.h.b16 %v154
    %v194 = vunpack.c.l.b16 %v155
    %v195 = vunpack.c.h.b16 %v155
    %v196 = vunpack.c.l.b16 %v156
    %v197 = vunpack.c.h.b16 %v156
    %v198 = vunpack.c.l.b16 %v157
    %v199 = vunpack.c.h.b16 %v157
    %v200 = vunpack.c.l.b16 %v158
    %v201 = vunpack.c.h.b16 %v158
    %v202 = vunpack.c.l.b16 %v159
    %v203 = vunpack.c.h.b16 %v159
    %v204 = vunpack.c.l.b16 %v160
    %v205 = vunpack.c.h.b16 %v160
    %v206 = vunpack.c.l.b16 %v161
    %v207 = vunpack.c.h.b16 %v161
    %v208 = vunpack.c.l.b16 %v162
    %v209 = vunpack.c.h.b16 %v162
    %v210 = vunpack.c.l.b16 %v163
    %v211 = vunpack.c.h.b16 %v163
    %v212 = vpack.c.b16 %v182, %v180
    %v213 = vpack.c.b16 %v183, %v181
    %v214 = vpack.c.b16 %v186, %v184
    %v215 = vpack.c.b16 %v187, %v185
    %v216 = vpack.c.b16 %v190, %v188
    %v217 = vpack.c.b16 %v191, %v189
    %v218 = vpack.c.b16 %v194, %v192
    %v219 = vpack.c.b16 %v195, %v193
    %v220 = vpack.c.b16 %v198, %v196
    %v221 = vpack.c.b16 %v199, %v197
    %v222 = vpack.c.b16 %v202, %v200
    %v223 = vpack.c.b16 %v203, %v201
    %v224 = vpack.c.b16 %v206, %v204
    %v225 = vpack.c.b16 %v207, %v205
    %v226 = vpack.c.b16 %v210, %v208
    %v227 = vpack.c.b16 %v211, %v209
    %244 = vmatprep.subr.bf16.mxu0 %v227
    %245 = vmatpush1.bf16.msra.mxu0 %v226
    %246 = vmatprep.subr.bf16.mxu0 %v225
    %247 = vmatpush1.bf16.msra.mxu0 %v224
    %248 = vmatprep.subr.bf16.mxu0 %v223
    %249 = vmatpush1.bf16.msra.mxu0 %v222
    %250 = vmatprep.subr.bf16.mxu0 %v221
    %251 = vmatpush1.bf16.msra.mxu0 %v220
    %252 = vmatprep.subr.bf16.mxu0 %v219
    %253 = vmatpush1.bf16.msra.mxu0 %v218
    %254 = vmatprep.subr.bf16.mxu0 %v217
    %255 = vmatpush1.bf16.msra.mxu0 %v216
    %256 = vmatprep.subr.bf16.mxu0 %v215
    %257 = vmatpush1.bf16.msra.mxu0 %v214
    %258 = vmatprep.subr.bf16.mxu0 %v213
    %259 = vmatpush1.bf16.msra.mxu0 %v212
    %260 = vmatprep.subr.bf16.mxu0 0
    %261 = vmatpush2.bf16.msra.mxu0 0
    %262 = vmatprep.subr.bf16.mxu0 0
    %263 = vmatpush2.bf16.msra.mxu0 0
    %264 = vmatprep.subr.bf16.mxu0 0
    %265 = vmatpush2.bf16.msra.mxu0 0
    %266 = vmatprep.subr.bf16.mxu0 0
    %267 = vmatpush2.bf16.msra.mxu0 0
    %268 = vmatprep.subr.bf16.mxu0 0
    %269 = vmatpush2.bf16.msra.mxu0 0
    %270 = vmatprep.subr.bf16.mxu0 0
    %271 = vmatpush2.bf16.msra.mxu0 0
    %272 = vmatprep.subr.bf16.mxu0 0
    %273 = vmatpush2.bf16.msra.mxu0 0
    %274 = vmatprep.subr.bf16.mxu0 0
    %275 = vmatpush2.bf16.msra.mxu0 0
    %276 = vmatprep.mubr.bf16.mxu0 0
    %277 = vmatmul.mubr.bf16.gmra.mxu0 %v147
    %v278 = vpop.f32.mrf.mxu0
    %v279 = vadd.f32 0.0, %v278
    %v280 = vpop.f32.mrf.mxu0
    %v281 = vadd.f32 0.0, %v280
    %v282 = vpop.f32.mrf.mxu0
    %v283 = vpop.f32.mrf.mxu0
    %284 = vdwg.mxu0
    %v286 = vlaneseq
    %v287 = vshrl.u32 %v286, 7
    %v288 = vsub.s32 0, %v287
    %v289 = vrot.slane %v146, %v288
    %v290 = vlaneseq
    %v291 = vshrl.u32 %v290, 7
    %v292 = vsub.s32 1, %v291
    %v293 = vrot.slane %v146, %v292
    %v296 = vadd.f32 %v289, %v279
    %v297 = vadd.f32 %v293, %v281
    %v298 = vmax.f32 %v296, 0.0
    %v299 = vmax.f32 %v297, 0.0
    %v300 = vld [vmem:[%s6] sm:$0x1]
    %v301 = vpack.c.bf16 %v298, %v298
    %v302 = vpack.c.bf16 %v299, %v299
    %v303 = vld [vmem:[#allocation7] sm:$0xf]
    %v304 = vld [vmem:[#allocation7 + $0x4] sm:$0xf]
    %v305 = vld [vmem:[#allocation7 + $0x8] sm:$0xf]
    %v306 = vld [vmem:[#allocation7 + $0xc] sm:$0xf]
    %v307 = vld [vmem:[#allocation7 + $0x10] sm:$0xf]
    %v308 = vld [vmem:[#allocation7 + $0x14] sm:$0xf]
    %v309 = vld [vmem:[#allocation7 + $0x18] sm:$0xf]
    %v310 = vld [vmem:[#allocation7 + $0x1c] sm:$0xf]
    %v311 = vld [vmem:[#allocation7 + $0x20] sm:$0xf]
    %v312 = vld [vmem:[#allocation7 + $0x24] sm:$0xf]
    %v313 = vld [vmem:[#allocation7 + $0x28] sm:$0xf]
    %v314 = vld [vmem:[#allocation7 + $0x2c] sm:$0xf]
    %v315 = vld [vmem:[#allocation7 + $0x30] sm:$0xf]
    %v316 = vld [vmem:[#allocation7 + $0x34] sm:$0xf]
    %v317 = vld [vmem:[#allocation7 + $0x38] sm:$0xf]
    %v318 = vld [vmem:[#allocation7 + $0x3c] sm:$0xf]
    %v319 = vld [vmem:[#allocation7 + $0x40] sm:$0xf]
    %v320 = vld [vmem:[#allocation7 + $0x44] sm:$0xf]
    %v321 = vld [vmem:[#allocation7 + $0x48] sm:$0xf]
    %v322 = vld [vmem:[#allocation7 + $0x4c] sm:$0xf]
    %v323 = vld [vmem:[#allocation7 + $0x50] sm:$0xf]
    %v324 = vld [vmem:[#allocation7 + $0x54] sm:$0xf]
    %v325 = vld [vmem:[#allocation7 + $0x58] sm:$0xf]
    %v326 = vld [vmem:[#allocation7 + $0x5c] sm:$0xf]
    %v327 = vld [vmem:[#allocation7 + $0x60] sm:$0xf]
    %v328 = vld [vmem:[#allocation7 + $0x64] sm:$0xf]
    %v329 = vld [vmem:[#allocation7 + $0x68] sm:$0xf]
    %v330 = vld [vmem:[#allocation7 + $0x6c] sm:$0xf]
    %v331 = vld [vmem:[#allocation7 + $0x70] sm:$0xf]
    %v332 = vld [vmem:[#allocation7 + $0x74] sm:$0xf]
    %v333 = vld [vmem:[#allocation7 + $0x78] sm:$0xf]
    %v334 = vld [vmem:[#allocation7 + $0x7c] sm:$0xf]
    %v367 = vunpack.c.l.b16 %v303
    %v368 = vunpack.c.l.b16 %v304
    %v369 = vunpack.c.l.b16 %v305
    %v370 = vunpack.c.l.b16 %v306
    %v371 = vunpack.c.l.b16 %v307
    %v372 = vunpack.c.l.b16 %v308
    %v373 = vunpack.c.l.b16 %v309
    %v374 = vunpack.c.l.b16 %v310
    %v375 = vunpack.c.l.b16 %v311
    %v376 = vunpack.c.l.b16 %v312
    %v377 = vunpack.c.l.b16 %v313
    %v378 = vunpack.c.l.b16 %v314
    %v379 = vunpack.c.l.b16 %v315
    %v380 = vunpack.c.l.b16 %v316
    %v381 = vunpack.c.l.b16 %v317
    %v382 = vunpack.c.l.b16 %v318
    %v383 = vunpack.c.l.b16 %v319
    %v384 = vunpack.c.l.b16 %v320
    %v385 = vunpack.c.l.b16 %v321
    %v386 = vunpack.c.l.b16 %v322
    %v387 = vunpack.c.l.b16 %v323
    %v388 = vunpack.c.l.b16 %v324
    %v389 = vunpack.c.l.b16 %v325
    %v390 = vunpack.c.l.b16 %v326
    %v391 = vunpack.c.l.b16 %v327
    %v392 = vunpack.c.l.b16 %v328
    %v393 = vunpack.c.l.b16 %v329
    %v394 = vunpack.c.l.b16 %v330
    %v395 = vunpack.c.l.b16 %v331
    %v396 = vunpack.c.l.b16 %v332
    %v397 = vunpack.c.l.b16 %v333
    %v398 = vunpack.c.l.b16 %v334
    %v399 = vpack.c.b16 %v368, %v367
    %v400 = vpack.c.b16 %v370, %v369
    %v401 = vpack.c.b16 %v372, %v371
    %v402 = vpack.c.b16 %v374, %v373
    %v403 = vpack.c.b16 %v376, %v375
    %v404 = vpack.c.b16 %v378, %v377
    %v405 = vpack.c.b16 %v380, %v379
    %v406 = vpack.c.b16 %v382, %v381
    %v407 = vpack.c.b16 %v384, %v383
    %v408 = vpack.c.b16 %v386, %v385
    %v409 = vpack.c.b16 %v388, %v387
    %v410 = vpack.c.b16 %v390, %v389
    %v411 = vpack.c.b16 %v392, %v391
    %v412 = vpack.c.b16 %v394, %v393
    %v413 = vpack.c.b16 %v396, %v395
    %v414 = vpack.c.b16 %v398, %v397
    %431 = vmatprep.subr.bf16.mxu0 0
    %432 = vmatpush1.bf16.msra.mxu0 %v406
    %433 = vmatprep.subr.bf16.mxu0 0
    %434 = vmatpush1.bf16.msra.mxu0 %v405
    %435 = vmatprep.subr.bf16.mxu0 0
    %436 = vmatpush1.bf16.msra.mxu0 %v404
    %437 = vmatprep.subr.bf16.mxu0 0
    %438 = vmatpush1.bf16.msra.mxu0 %v403
    %439 = vmatprep.subr.bf16.mxu0 0
    %440 = vmatpush1.bf16.msra.mxu0 %v402
    %441 = vmatprep.subr.bf16.mxu0 0
    %442 = vmatpush1.bf16.msra.mxu0 %v401
    %443 = vmatprep.subr.bf16.mxu0 0
    %444 = vmatpush1.bf16.msra.mxu0 %v400
    %445 = vmatprep.subr.bf16.mxu0 0
    %446 = vmatpush1.bf16.msra.mxu0 %v399
    %447 = vmatprep.subr.bf16.mxu0 0
    %448 = vmatpush2.bf16.msra.mxu0 %v414
    %449 = vmatprep.subr.bf16.mxu0 0
    %450 = vmatpush2.bf16.msra.mxu0 %v413
    %451 = vmatprep.subr.bf16.mxu0 0
    %452 = vmatpush2.bf16.msra.mxu0 %v412
    %453 = vmatprep.subr.bf16.mxu0 0
    %454 = vmatpush2.bf16.msra.mxu0 %v411
    %455 = vmatprep.subr.bf16.mxu0 0
    %456 = vmatpush2.bf16.msra.mxu0 %v410
    %457 = vmatprep.subr.bf16.mxu0 0
    %458 = vmatpush2.bf16.msra.mxu0 %v409
    %459 = vmatprep.subr.bf16.mxu0 0
    %460 = vmatpush2.bf16.msra.mxu0 %v408
    %461 = vmatprep.subr.bf16.mxu0 0
    %462 = vmatpush2.bf16.msra.mxu0 %v407
    %463 = vmatprep.mubr.bf16.mxu0 %v302
    %464 = vmatmul.mubr.bf16.gmra.mxu0 %v301
    %v465 = vpop.f32.mrf.mxu0
    %v466 = vadd.f32 0.0, %v465
    %v467 = vpop.f32.mrf.mxu0
    %v468 = vpop.f32.mrf.mxu0
    %v469 = vpop.f32.mrf.mxu0
    %470 = vdwg.mxu0
    %v472 = vlaneseq
    %v473 = vshrl.u32 %v472, 7
    %v474 = vsub.s32 0, %v473
    %v475 = vrot.slane %v300, %v474
    %v477 = vadd.f32 %v475, %v466
    %v478 = vmax.f32 %v477, 0.0
    %v479 = vld [vmem:[%s7] sm:$0x1]
    %v481 = vlaneseq
    %v482 = vshrl.u32 %v481, 7
    %v483 = vsub.s32 0, %v482
    %v484 = vrot.slane %v479, %v483
    %v486 = vmul.f32 %v478, %v484
    %487 = vadd.xlane.f32.xlu0 %v486
    %v488 = vpop.xlane.xlu0 %487
    %v489 = vld [vmem:[#allocation2] sm:$0x1]
    %v491 = vlaneseq
    %v492 = vshrl.u32 %v491, 7
    %v493 = vsub.s32 0, %v492
    %v494 = vrot.slane %v489, %v493
    %v496 = vadd.f32 %v488, %v494
    %vm497 = vcmask 7168
    %498 = vst.msk [vmem:[%s9] sm:$0xff] %vm497, %v496
    // Predicated region
    $region50: #{linear_net_forward.1} parent=1 // pred_check
      _
    $region51: #{linear_net_forward.1} parent=1 // pred_check_branch
      %500 = sbr.rel (0) target = $region53
    $region52: #{linear_net_forward.1} parent=1 // pred_region
      _
    $region53: #{linear_net_forward.1} parent=1 // pred_fallthru
      _
    // Predicated region
    $region54: #{linear_net_forward.1} parent=1 // pred_check
      _
    $region55: #{linear_net_forward.1} parent=1 // pred_check_branch
      %502 = sbr.rel (0) target = $region57
    $region56: #{linear_net_forward.1} parent=1 // pred_region
      _
    $region57: #{linear_net_forward.1} parent=1 // pred_fallthru
      _
    %503 = vsyncpa [#allocation4], 1
    %504 = vsyncpa [#allocation6], 1

</llo_original>
